<compile_context>
chip_gen: v7x
topology: tpu7x:2x2x1
jax: 0.10.0
libtpu: 0.0.40
codegen_flags: <defaults>
</compile_context>

<pallas_src>
import jax
import jax.numpy as jnp
from jax.experimental import pallas as pl
from jax.experimental.pallas import tpu as pltpu

LANES = 128
_ROW_ALIGN = 32      # covers int8 (32,128), bf16 (16,128) and f32 (8,128) tiling


def _cdiv(a, b):
    return -(-a // b)


def _round_up(a, b):
    return _cdiv(a, b) * b


def _tpu_params():
    """Return (num_tensorcores, vmem_limit_bytes, tile_budget_bytes)."""
    info = None
    try:
        info = pltpu.get_tpu_info()
    except Exception:
        pass

    vmem_cap = getattr(info, "vmem_capacity_bytes", None) if info is not None else None
    if not isinstance(vmem_cap, int) or vmem_cap <= 0:
        vmem_cap = 64 * 1024 * 1024          # conservative fallback: v7x per-core VMEM

    # TensorCores per chip sharing this kernel (2 on v7x).  Defaults to 1 if the
    # running JAX does not expose a per-chip core count on TpuInfo.
    num_cores = 1
    if info is not None:
        for attr in ("num_cores", "num_tensorcores", "tensorcore_count",
                     "num_cores_per_chip", "core_count"):
            v = getattr(info, attr, None)
            if isinstance(v, int) and 2 <= v <= 4:
                num_cores = v
                break

    vmem_limit = int(min(vmem_cap * 3 // 4, 100 * 1024 * 1024))
    budget = vmem_limit // 2                 # double-buffered inputs + live f32 slabs
    return num_cores, vmem_limit, budget


def _combo_loss_kernel(pred_ref, tgt_ref, ce_ref, inter_ref, union_ref):
    t = pl.program_id(1)

    # Zero the resident (per-core) accumulator blocks on the first row tile.
    @pl.when(t == 0)
    def _init():
        ce_ref[...] = jnp.zeros_like(ce_ref)
        inter_ref[...] = jnp.zeros_like(inter_ref)
        union_ref[...] = jnp.zeros_like(union_ref)

    C = pred_ref.shape[1]
    tgt = tgt_ref[...].astype(jnp.int32)                     # (B, TR, L)

    # ---- class max in the input dtype (exact for max), one cast to f32 --------
    m = pred_ref[:, 0]
    for c in range(1, C):
        m = jnp.maximum(m, pred_ref[:, c])
    m = m.astype(jnp.float32)

    # ---- stable softmax statistics; per-class slice + cast (no full-tile temp) -
    # NOTE: for very large C the stored es list could be chunked / recomputed to
    # bound VMEM, but the tile-sizing formula already accounts for C slabs.
    es = []                                                  # exp(x_c - m), reused in dice pass
    s = None
    z_t = jnp.zeros_like(m)                                  # (x[target] - m)
    for c in range(C):
        z_c = pred_ref[:, c].astype(jnp.float32) - m
        e_c = jnp.exp(z_c)
        es.append(e_c)
        s = e_c if s is None else s + e_c
        z_t = z_t + jnp.where(tgt == c, z_c, 0.0)

    log_s = jnp.log(s)
    # Exact reciprocal keeps dice probabilities and the epilogue padding
    # correction consistent with the reference (approx vrcp injects ~2^-12
    # relative error into every probability).
    inv_s = pl.reciprocal(s, approx=False)

    # ---- cross-entropy partial sums: lane-dense (B, 128) accumulator ----------
    ce_ref[0, :, :] += jnp.sum(log_s - z_t, axis=1)          # reduce rows -> (B, L)

    # ---- per-class dice partial sums: 1 compare + 2 selects per class, and a
    # ---- single stacked accumulate per tile (one RMW instead of 2*C) ----------
    inter_cs = []
    union_cs = []
    for c in range(C):
        p_c = es[c] * inv_s                                  # softmax prob of class c
        is_c = tgt == c
        inter_cs.append(jnp.sum(jnp.where(is_c, p_c, 0.0), axis=1))       # (B, L)
        union_cs.append(jnp.sum(jnp.where(is_c, p_c + 1.0, p_c), axis=1))  # (B, L)
    inter_ref[0] += jnp.stack(inter_cs, axis=0)              # (C, B, L)
    union_ref[0] += jnp.stack(union_cs, axis=0)


def combo_loss(pred, target, *, smooth=1.0, w_ce=1.0, w_dice=1.0):
    """ComboLoss = w_ce * CrossEntropy + w_dice * DiceLoss (ignore_index=None).

    pred:   (B, C, H, W) float (f32 or bf16; bf16 halves the pred HBM traffic)
    target: (B, H, W) integer class indices in [0, C)
    """
    # TODO(synk): ignore_index masking is not implemented (module default is None).
    B, C, H, W = pred.shape
    HW = H * W

    ncore, vmem_limit, budget = _tpu_params()

    # Target travels in the narrowest dtype that also holds the padding sentinel C
    # (cuts HBM bytes; biggest relative win on the most memory-bound part, v5e).
    if C <= 127:
        tgt_dtype = jnp.int8
    elif C <= 32767:
        tgt_dtype = jnp.int16
    else:
        tgt_dtype = jnp.int32
    ebytes = jnp.dtype(pred.dtype).itemsize
    tbytes = jnp.dtype(tgt_dtype).itemsize

    # ---- tile sizing: pixels on (rows, 128); budget the double-buffered input
    # ---- blocks plus ~(C + 8) live f32 slabs (es list, m/s/log_s/inv_s/z_t, ...).
    rows = _cdiv(HW, LANES)
    bytes_per_row = (2 * B * C * LANES * ebytes
                     + 2 * B * LANES * tbytes
                     + (C + 8) * B * LANES * 4)
    tr_cap = max(_ROW_ALIGN, (budget // bytes_per_row) // _ROW_ALIGN * _ROW_ALIGN)
    tr_cap = min(tr_cap, 2048)
    rows_per_core = _cdiv(rows, ncore)
    tile_rows = int(min(tr_cap, _round_up(rows_per_core, _ROW_ALIGN)))
    tiles_per_core = int(_cdiv(rows_per_core, tile_rows))
    rows_pad = ncore * tiles_per_core * tile_rows
    hw_pad = rows_pad * LANES
    n_pad = hw_pad - HW                                       # padded pixels per image

    x = pred.reshape(B, C, HW)                                # keep native dtype
    tgt = target.reshape(B, HW).astype(tgt_dtype)
    if n_pad:
        # Padded pixels: logits == 0 and label == C (never matches a real class),
        # so each contributes exactly log(C) to the CE sum and 1/C to every class
        # union (and nothing to inter); both totals are removed in the epilogue.
        x = jnp.pad(x, ((0, 0), (0, 0), (0, n_pad)))
        tgt = jnp.pad(tgt, ((0, 0), (0, n_pad)), constant_values=C)
    x = x.reshape(B, C, rows_pad, LANES)
    tgt = tgt.reshape(B, rows_pad, LANES)

    cost = pl.CostEstimate(
        flops=14 * B * C * hw_pad,
        transcendentals=(C + 2) * B * hw_pad,
        bytes_accessed=x.size * ebytes + tgt.size * tbytes
                       + 4 * ncore * (2 * C + 1) * B * LANES,
    )

    grid_spec = pltpu.PrefetchScalarGridSpec(
        num_scalar_prefetch=0,
        grid=(ncore, tiles_per_core),
        in_specs=[
            pl.BlockSpec((B, C, tile_rows, LANES),
                         lambda p, t: (0, 0, p * tiles_per_core + t, 0)),
            pl.BlockSpec((B, tile_rows, LANES),
                         lambda p, t: (0, p * tiles_per_core + t, 0)),
        ],
        out_specs=(
            pl.BlockSpec((1, B, LANES), lambda p, t: (p, 0, 0)),
            pl.BlockSpec((1, C, B, LANES), lambda p, t: (p, 0, 0, 0)),
            pl.BlockSpec((1, C, B, LANES), lambda p, t: (p, 0, 0, 0)),
        ),
    )

    # Only CORE_PARALLEL changes codegen for the core-split axis; on single-TC
    # chips the axis has extent 1 and is a plain (degenerate) serial axis.
    core_sem = pltpu.CORE_PARALLEL if ncore > 1 else pltpu.ARBITRARY

    ce_parts, inter_parts, union_parts = pl.pallas_call(
        _combo_loss_kernel,
        out_shape=(
            jax.ShapeDtypeStruct((ncore, B, LANES), jnp.float32),
            jax.ShapeDtypeStruct((ncore, C, B, LANES), jnp.float32),
            jax.ShapeDtypeStruct((ncore, C, B, LANES), jnp.float32),
        ),
        grid_spec=grid_spec,
        compiler_params=pltpu.CompilerParams(
            dimension_semantics=(core_sem, pltpu.ARBITRARY),
            vmem_limit_bytes=vmem_limit,
        ),
        cost_estimate=cost,
    )(x, tgt)

    # ---- tiny scalar epilogue in plain JAX ------------------------------------
    ce_sum = jnp.sum(ce_parts, dtype=jnp.float32)
    inter = jnp.sum(inter_parts, axis=(0, 3), dtype=jnp.float32)    # (C, B)
    union = jnp.sum(union_parts, axis=(0, 3), dtype=jnp.float32)    # (C, B)
    if n_pad:
        ce_sum = ce_sum - (B * n_pad) * jnp.log(jnp.asarray(C, jnp.float32))
        union = union - jnp.float32(n_pad) / jnp.float32(C)
    ce = ce_sum / (B * HW)
    dice = jnp.sum((2.0 * inter + smooth) / (union + smooth)) / (B * C)
    return w_ce * ce + w_dice * (1.0 - dice)


def _reference_combo_loss(pred, target, smooth=1.0, w_ce=1.0, w_dice=1.0):
    """Pure-JAX reference mirroring the PyTorch ComboLoss forward."""
    B, C, H, W = pred.shape
    logp = jax.nn.log_softmax(pred.astype(jnp.float32), axis=1)
    p = jnp.exp(logp)
    oh = jax.nn.one_hot(target, C, axis=1, dtype=jnp.float32)       # (B, C, H, W)
    ce = -jnp.mean(jnp.sum(oh * logp, axis=1))
    inter = jnp.sum(p * oh, axis=(2, 3))                            # (B, C)
    union = jnp.sum(p, axis=(2, 3)) + jnp.sum(oh, axis=(2, 3))      # (B, C)
    dice = jnp.sum((2.0 * inter + smooth) / (union + smooth), axis=1)
    dice_loss = 1.0 - jnp.mean(dice) / C
    return w_ce * ce + w_dice * dice_loss


if __name__ == "__main__":
    key = jax.random.PRNGKey(0)
    k1, k2 = jax.random.split(key)

    B, C, H, W = 2, 4, 16, 16
    pred = jax.random.normal(k1, (B, C, H, W), dtype=jnp.float32)
    target = jax.random.randint(k2, (B, H, W), 0, C, dtype=jnp.int32)

    loss = jax.block_until_ready(combo_loss(pred, target))
    ref = _reference_combo_loss(pred, target)
    assert jnp.allclose(loss, ref, atol=5e-3, rtol=5e-3), (loss, ref)

    # bf16 inputs (half the pred HBM traffic); kernel upcasts to f32 internally.
    pred_bf16 = pred.astype(jnp.bfloat16)
    loss_bf16 = jax.block_until_ready(combo_loss(pred_bf16, target))
    ref_bf16 = _reference_combo_loss(pred_bf16.astype(jnp.float32), target)
    assert jnp.allclose(loss_bf16, ref_bf16, atol=5e-3, rtol=5e-3), (loss_bf16, ref_bf16)

    print("KERNEL_OK")
</pallas_src>

<mosaic_0001>
module attributes {stable_mosaic.version = 11 : i64} {
  func.func @_combo_loss_kernel(%arg0: i32, %arg1: i32, %arg2: memref<2x4x32x128xf32, #tpu.memory_space<vmem>>, %arg3: memref<2x32x128xi8, #tpu.memory_space<vmem>>, %arg4: memref<1x2x128xf32, #tpu.memory_space<vmem>>, %arg5: memref<1x4x2x128xf32, #tpu.memory_space<vmem>>, %arg6: memref<1x4x2x128xf32, #tpu.memory_space<vmem>>) attributes {dimension_semantics = [#tpu.dimension_semantics<arbitrary>, #tpu.dimension_semantics<arbitrary>], iteration_bounds = array<i64: 1, 1>, scalar_prefetch = 0 : i64, scratch_operands = 0 : i64, tpu.core_type = #tpu.core_type<tc>, window_params = [{transform_indices = @transform_0, window_bounds = array<i64: 2, 4, 32, 128>}, {transform_indices = @transform_1, window_bounds = array<i64: 2, 32, 128>}, {transform_indices = @transform_2, window_bounds = array<i64: 1, 2, 128>}, {transform_indices = @transform_3, window_bounds = array<i64: 1, 4, 2, 128>}, {transform_indices = @transform_4, window_bounds = array<i64: 1, 4, 2, 128>}]} {
    %c0_i32 = arith.constant 0 : i32
    %0 = arith.cmpi eq, %arg1, %c0_i32 : i32
    %1 = arith.extui %0 : i1 to i32
    %c0_i32_0 = arith.constant 0 : i32
    %2 = arith.cmpi ne, %1, %c0_i32_0 : i32
    scf.if %2 {
      %cst_80 = arith.constant 0.000000e+00 : f32
      %128 = vector.broadcast %cst_80 : f32 to vector<1x2x128xf32>
      %c0_81 = arith.constant 0 : index
      %c0_82 = arith.constant 0 : index
      %c0_83 = arith.constant 0 : index
      %129 = vector.load %arg4[%c0_81, %c0_82, %c0_83] : memref<1x2x128xf32, #tpu.memory_space<vmem>>, vector<1x2x128xf32>
      tpu.vector_store %arg4[%c0_81, %c0_82, %c0_83], %128 {strides = array<i32>} : memref<1x2x128xf32, #tpu.memory_space<vmem>>, vector<1x2x128xf32>,
      %cst_84 = arith.constant 0.000000e+00 : f32
      %130 = vector.broadcast %cst_84 : f32 to vector<1x4x2x128xf32>
      %c0_85 = arith.constant 0 : index
      %c0_86 = arith.constant 0 : index
      %c0_87 = arith.constant 0 : index
      %c0_88 = arith.constant 0 : index
      %131 = vector.load %arg5[%c0_85, %c0_86, %c0_87, %c0_88] : memref<1x4x2x128xf32, #tpu.memory_space<vmem>>, vector<1x4x2x128xf32>
      tpu.vector_store %arg5[%c0_85, %c0_86, %c0_87, %c0_88], %130 {strides = array<i32>} : memref<1x4x2x128xf32, #tpu.memory_space<vmem>>, vector<1x4x2x128xf32>,
      %cst_89 = arith.constant 0.000000e+00 : f32
      %132 = vector.broadcast %cst_89 : f32 to vector<1x4x2x128xf32>
      %c0_90 = arith.constant 0 : index
      %c0_91 = arith.constant 0 : index
      %c0_92 = arith.constant 0 : index
      %c0_93 = arith.constant 0 : index
      %133 = vector.load %arg6[%c0_90, %c0_91, %c0_92, %c0_93] : memref<1x4x2x128xf32, #tpu.memory_space<vmem>>, vector<1x4x2x128xf32>
      tpu.vector_store %arg6[%c0_90, %c0_91, %c0_92, %c0_93], %132 {strides = array<i32>} : memref<1x4x2x128xf32, #tpu.memory_space<vmem>>, vector<1x4x2x128xf32>,
    } else {
    }
    %c0 = arith.constant 0 : index
    %c0_1 = arith.constant 0 : index
    %c0_2 = arith.constant 0 : index
    %3 = vector.load %arg3[%c0, %c0_1, %c0_2] : memref<2x32x128xi8, #tpu.memory_space<vmem>>, vector<2x32x128xi8>
    %4 = arith.extsi %3 : vector<2x32x128xi8> to vector<2x32x128xi32>
    %c0_3 = arith.constant 0 : index
    %c0_4 = arith.constant 0 : index
    %c0_5 = arith.constant 0 : index
    %c0_6 = arith.constant 0 : index
    %5 = vector.load %arg2[%c0_3, %c0_4, %c0_5, %c0_6] : memref<2x4x32x128xf32, #tpu.memory_space<vmem>>, vector<2x1x32x128xf32>
    %6 = vector.shape_cast %5 : vector<2x1x32x128xf32> to vector<2x32x128xf32>
    %c0_7 = arith.constant 0 : index
    %c1 = arith.constant 1 : index
    %c0_8 = arith.constant 0 : index
    %c0_9 = arith.constant 0 : index
    %7 = vector.load %arg2[%c0_7, %c1, %c0_8, %c0_9] : memref<2x4x32x128xf32, #tpu.memory_space<vmem>>, vector<2x1x32x128xf32>
    %8 = vector.shape_cast %7 : vector<2x1x32x128xf32> to vector<2x32x128xf32>
    %9 = arith.maximumf %6, %8 : vector<2x32x128xf32>
    %c0_10 = arith.constant 0 : index
    %c2 = arith.constant 2 : index
    %c0_11 = arith.constant 0 : index
    %c0_12 = arith.constant 0 : index
    %10 = vector.load %arg2[%c0_10, %c2, %c0_11, %c0_12] : memref<2x4x32x128xf32, #tpu.memory_space<vmem>>, vector<2x1x32x128xf32>
    %11 = vector.shape_cast %10 : vector<2x1x32x128xf32> to vector<2x32x128xf32>
    %12 = arith.maximumf %9, %11 : vector<2x32x128xf32>
    %c0_13 = arith.constant 0 : index
    %c3 = arith.constant 3 : index
    %c0_14 = arith.constant 0 : index
    %c0_15 = arith.constant 0 : index
    %13 = vector.load %arg2[%c0_13, %c3, %c0_14, %c0_15] : memref<2x4x32x128xf32, #tpu.memory_space<vmem>>, vector<2x1x32x128xf32>
    %14 = vector.shape_cast %13 : vector<2x1x32x128xf32> to vector<2x32x128xf32>
    %15 = arith.maximumf %12, %14 : vector<2x32x128xf32>
    %cst = arith.constant 0.000000e+00 : f32
    %16 = vector.broadcast %cst : f32 to vector<2x32x128xf32>
    %c0_16 = arith.constant 0 : index
    %c0_17 = arith.constant 0 : index
    %c0_18 = arith.constant 0 : index
    %c0_19 = arith.constant 0 : index
    %17 = vector.load %arg2[%c0_16, %c0_17, %c0_18, %c0_19] : memref<2x4x32x128xf32, #tpu.memory_space<vmem>>, vector<2x1x32x128xf32>
    %18 = vector.shape_cast %17 : vector<2x1x32x128xf32> to vector<2x32x128xf32>
    %19 = arith.subf %18, %15 : vector<2x32x128xf32>
    %20 = math.exp %19 : vector<2x32x128xf32>
    %c0_i32_20 = arith.constant 0 : i32
    %21 = vector.broadcast %c0_i32_20 : i32 to vector<2x32x128xi32>
    %22 = arith.cmpi eq, %4, %21 : vector<2x32x128xi32>
    %cst_21 = arith.constant 0.000000e+00 : f32
    %23 = vector.broadcast %cst_21 : f32 to vector<2x32x128xf32>
    %24 = arith.select %22, %19, %23 : vector<2x32x128xi1>, vector<2x32x128xf32>
    %25 = arith.addf %16, %24 : vector<2x32x128xf32>
    %c0_22 = arith.constant 0 : index
    %c1_23 = arith.constant 1 : index
    %c0_24 = arith.constant 0 : index
    %c0_25 = arith.constant 0 : index
    %26 = vector.load %arg2[%c0_22, %c1_23, %c0_24, %c0_25] : memref<2x4x32x128xf32, #tpu.memory_space<vmem>>, vector<2x1x32x128xf32>
    %27 = vector.shape_cast %26 : vector<2x1x32x128xf32> to vector<2x32x128xf32>
    %28 = arith.subf %27, %15 : vector<2x32x128xf32>
    %29 = math.exp %28 : vector<2x32x128xf32>
    %30 = arith.addf %20, %29 : vector<2x32x128xf32>
    %c1_i32 = arith.constant 1 : i32
    %31 = vector.broadcast %c1_i32 : i32 to vector<2x32x128xi32>
    %32 = arith.cmpi eq, %4, %31 : vector<2x32x128xi32>
    %cst_26 = arith.constant 0.000000e+00 : f32
    %33 = vector.broadcast %cst_26 : f32 to vector<2x32x128xf32>
    %34 = arith.select %32, %28, %33 : vector<2x32x128xi1>, vector<2x32x128xf32>
    %35 = arith.addf %25, %34 : vector<2x32x128xf32>
    %c0_27 = arith.constant 0 : index
    %c2_28 = arith.constant 2 : index
    %c0_29 = arith.constant 0 : index
    %c0_30 = arith.constant 0 : index
    %36 = vector.load %arg2[%c0_27, %c2_28, %c0_29, %c0_30] : memref<2x4x32x128xf32, #tpu.memory_space<vmem>>, vector<2x1x32x128xf32>
    %37 = vector.shape_cast %36 : vector<2x1x32x128xf32> to vector<2x32x128xf32>
    %38 = arith.subf %37, %15 : vector<2x32x128xf32>
    %39 = math.exp %38 : vector<2x32x128xf32>
    %40 = arith.addf %30, %39 : vector<2x32x128xf32>
    %c2_i32 = arith.constant 2 : i32
    %41 = vector.broadcast %c2_i32 : i32 to vector<2x32x128xi32>
    %42 = arith.cmpi eq, %4, %41 : vector<2x32x128xi32>
    %cst_31 = arith.constant 0.000000e+00 : f32
    %43 = vector.broadcast %cst_31 : f32 to vector<2x32x128xf32>
    %44 = arith.select %42, %38, %43 : vector<2x32x128xi1>, vector<2x32x128xf32>
    %45 = arith.addf %35, %44 : vector<2x32x128xf32>
    %c0_32 = arith.constant 0 : index
    %c3_33 = arith.constant 3 : index
    %c0_34 = arith.constant 0 : index
    %c0_35 = arith.constant 0 : index
    %46 = vector.load %arg2[%c0_32, %c3_33, %c0_34, %c0_35] : memref<2x4x32x128xf32, #tpu.memory_space<vmem>>, vector<2x1x32x128xf32>
    %47 = vector.shape_cast %46 : vector<2x1x32x128xf32> to vector<2x32x128xf32>
    %48 = arith.subf %47, %15 : vector<2x32x128xf32>
    %49 = math.exp %48 : vector<2x32x128xf32>
    %50 = arith.addf %40, %49 : vector<2x32x128xf32>
    %c3_i32 = arith.constant 3 : i32
    %51 = vector.broadcast %c3_i32 : i32 to vector<2x32x128xi32>
    %52 = arith.cmpi eq, %4, %51 : vector<2x32x128xi32>
    %cst_36 = arith.constant 0.000000e+00 : f32
    %53 = vector.broadcast %cst_36 : f32 to vector<2x32x128xf32>
    %54 = arith.select %52, %48, %53 : vector<2x32x128xi1>, vector<2x32x128xf32>
    %55 = arith.addf %45, %54 : vector<2x32x128xf32>
    %56 = math.log %50 : vector<2x32x128xf32>
    %57 = tpu.reciprocal %50 : vector<2x32x128xf32> -> vector<2x32x128xf32>
    %c0_37 = arith.constant 0 : index
    %c0_38 = arith.constant 0 : index
    %c0_39 = arith.constant 0 : index
    %58 = vector.load %arg4[%c0_37, %c0_38, %c0_39] : memref<1x2x128xf32, #tpu.memory_space<vmem>>, vector<1x2x128xf32>
    %59 = vector.shape_cast %58 : vector<1x2x128xf32> to vector<2x128xf32>
    %60 = arith.subf %56, %55 : vector<2x32x128xf32>
    %cst_40 = arith.constant dense<0.000000e+00> : vector<2x128xf32>
    %61 = vector.multi_reduction <add>, %60, %cst_40 [1] : vector<2x32x128xf32> to vector<2x128xf32>
    %62 = arith.addf %59, %61 : vector<2x128xf32>
    %c0_41 = arith.constant 0 : index
    %c0_42 = arith.constant 0 : index
    %c0_43 = arith.constant 0 : index
    %63 = vector.load %arg4[%c0_41, %c0_42, %c0_43] : memref<1x2x128xf32, #tpu.memory_space<vmem>>, vector<1x2x128xf32>
    %64 = vector.shape_cast %63 : vector<1x2x128xf32> to vector<2x128xf32>
    %65 = vector.shape_cast %62 : vector<2x128xf32> to vector<1x2x128xf32>
    tpu.vector_store %arg4[%c0_41, %c0_42, %c0_43], %65 {strides = array<i32>} : memref<1x2x128xf32, #tpu.memory_space<vmem>>, vector<1x2x128xf32>,
    %66 = arith.mulf %20, %57 : vector<2x32x128xf32>
    %c0_i32_44 = arith.constant 0 : i32
    %67 = vector.broadcast %c0_i32_44 : i32 to vector<2x32x128xi32>
    %68 = arith.cmpi eq, %4, %67 : vector<2x32x128xi32>
    %cst_45 = arith.constant 0.000000e+00 : f32
    %69 = vector.broadcast %cst_45 : f32 to vector<2x32x128xf32>
    %70 = arith.select %68, %66, %69 : vector<2x32x128xi1>, vector<2x32x128xf32>
    %cst_46 = arith.constant dense<0.000000e+00> : vector<2x128xf32>
    %71 = vector.multi_reduction <add>, %70, %cst_46 [1] : vector<2x32x128xf32> to vector<2x128xf32>
    %cst_47 = arith.constant 1.000000e+00 : f32
    %72 = vector.broadcast %cst_47 : f32 to vector<2x32x128xf32>
    %73 = arith.addf %66, %72 : vector<2x32x128xf32>
    %74 = arith.select %68, %73, %66 : vector<2x32x128xi1>, vector<2x32x128xf32>
    %cst_48 = arith.constant dense<0.000000e+00> : vector<2x128xf32>
    %75 = vector.multi_reduction <add>, %74, %cst_48 [1] : vector<2x32x128xf32> to vector<2x128xf32>
    %76 = arith.mulf %29, %57 : vector<2x32x128xf32>
    %c1_i32_49 = arith.constant 1 : i32
    %77 = vector.broadcast %c1_i32_49 : i32 to vector<2x32x128xi32>
    %78 = arith.cmpi eq, %4, %77 : vector<2x32x128xi32>
    %cst_50 = arith.constant 0.000000e+00 : f32
    %79 = vector.broadcast %cst_50 : f32 to vector<2x32x128xf32>
    %80 = arith.select %78, %76, %79 : vector<2x32x128xi1>, vector<2x32x128xf32>
    %cst_51 = arith.constant dense<0.000000e+00> : vector<2x128xf32>
    %81 = vector.multi_reduction <add>, %80, %cst_51 [1] : vector<2x32x128xf32> to vector<2x128xf32>
    %cst_52 = arith.constant 1.000000e+00 : f32
    %82 = vector.broadcast %cst_52 : f32 to vector<2x32x128xf32>
    %83 = arith.addf %76, %82 : vector<2x32x128xf32>
    %84 = arith.select %78, %83, %76 : vector<2x32x128xi1>, vector<2x32x128xf32>
    %cst_53 = arith.constant dense<0.000000e+00> : vector<2x128xf32>
    %85 = vector.multi_reduction <add>, %84, %cst_53 [1] : vector<2x32x128xf32> to vector<2x128xf32>
    %86 = arith.mulf %39, %57 : vector<2x32x128xf32>
    %c2_i32_54 = arith.constant 2 : i32
    %87 = vector.broadcast %c2_i32_54 : i32 to vector<2x32x128xi32>
    %88 = arith.cmpi eq, %4, %87 : vector<2x32x128xi32>
    %cst_55 = arith.constant 0.000000e+00 : f32
    %89 = vector.broadcast %cst_55 : f32 to vector<2x32x128xf32>
    %90 = arith.select %88, %86, %89 : vector<2x32x128xi1>, vector<2x32x128xf32>
    %cst_56 = arith.constant dense<0.000000e+00> : vector<2x128xf32>
    %91 = vector.multi_reduction <add>, %90, %cst_56 [1] : vector<2x32x128xf32> to vector<2x128xf32>
    %cst_57 = arith.constant 1.000000e+00 : f32
    %92 = vector.broadcast %cst_57 : f32 to vector<2x32x128xf32>
    %93 = arith.addf %86, %92 : vector<2x32x128xf32>
    %94 = arith.select %88, %93, %86 : vector<2x32x128xi1>, vector<2x32x128xf32>
    %cst_58 = arith.constant dense<0.000000e+00> : vector<2x128xf32>
    %95 = vector.multi_reduction <add>, %94, %cst_58 [1] : vector<2x32x128xf32> to vector<2x128xf32>
    %96 = arith.mulf %49, %57 : vector<2x32x128xf32>
    %c3_i32_59 = arith.constant 3 : i32
    %97 = vector.broadcast %c3_i32_59 : i32 to vector<2x32x128xi32>
    %98 = arith.cmpi eq, %4, %97 : vector<2x32x128xi32>
    %cst_60 = arith.constant 0.000000e+00 : f32
    %99 = vector.broadcast %cst_60 : f32 to vector<2x32x128xf32>
    %100 = arith.select %98, %96, %99 : vector<2x32x128xi1>, vector<2x32x128xf32>
    %cst_61 = arith.constant dense<0.000000e+00> : vector<2x128xf32>
    %101 = vector.multi_reduction <add>, %100, %cst_61 [1] : vector<2x32x128xf32> to vector<2x128xf32>
    %cst_62 = arith.constant 1.000000e+00 : f32
    %102 = vector.broadcast %cst_62 : f32 to vector<2x32x128xf32>
    %103 = arith.addf %96, %102 : vector<2x32x128xf32>
    %104 = arith.select %98, %103, %96 : vector<2x32x128xi1>, vector<2x32x128xf32>
    %cst_63 = arith.constant dense<0.000000e+00> : vector<2x128xf32>
    %105 = vector.multi_reduction <add>, %104, %cst_63 [1] : vector<2x32x128xf32> to vector<2x128xf32>
    %c0_64 = arith.constant 0 : index
    %c0_65 = arith.constant 0 : index
    %c0_66 = arith.constant 0 : index
    %c0_67 = arith.constant 0 : index
    %106 = vector.load %arg5[%c0_64, %c0_65, %c0_66, %c0_67] : memref<1x4x2x128xf32, #tpu.memory_space<vmem>>, vector<1x4x2x128xf32>
    %107 = vector.shape_cast %106 : vector<1x4x2x128xf32> to vector<4x2x128xf32>
    %108 = vector.shape_cast %71 : vector<2x128xf32> to vector<1x2x128xf32>
    %109 = vector.shape_cast %81 : vector<2x128xf32> to vector<1x2x128xf32>
    %110 = vector.shape_cast %91 : vector<2x128xf32> to vector<1x2x128xf32>
    %111 = vector.shape_cast %101 : vector<2x128xf32> to vector<1x2x128xf32>
    %112 = tpu.concatenate %108, %109, %110, %111 in 0 : vector<1x2x128xf32>, vector<1x2x128xf32>, vector<1x2x128xf32>, vector<1x2x128xf32> -> vector<4x2x128xf32>
    %113 = arith.addf %107, %112 : vector<4x2x128xf32>
    %c0_68 = arith.constant 0 : index
    %c0_69 = arith.constant 0 : index
    %c0_70 = arith.constant 0 : index
    %c0_71 = arith.constant 0 : index
    %114 = vector.load %arg5[%c0_68, %c0_69, %c0_70, %c0_71] : memref<1x4x2x128xf32, #tpu.memory_space<vmem>>, vector<1x4x2x128xf32>
    %115 = vector.shape_cast %114 : vector<1x4x2x128xf32> to vector<4x2x128xf32>
    %116 = vector.shape_cast %113 : vector<4x2x128xf32> to vector<1x4x2x128xf32>
    tpu.vector_store %arg5[%c0_68, %c0_69, %c0_70, %c0_71], %116 {strides = array<i32>} : memref<1x4x2x128xf32, #tpu.memory_space<vmem>>, vector<1x4x2x128xf32>,
    %c0_72 = arith.constant 0 : index
    %c0_73 = arith.constant 0 : index
    %c0_74 = arith.constant 0 : index
    %c0_75 = arith.constant 0 : index
    %117 = vector.load %arg6[%c0_72, %c0_73, %c0_74, %c0_75] : memref<1x4x2x128xf32, #tpu.memory_space<vmem>>, vector<1x4x2x128xf32>
    %118 = vector.shape_cast %117 : vector<1x4x2x128xf32> to vector<4x2x128xf32>
    %119 = vector.shape_cast %75 : vector<2x128xf32> to vector<1x2x128xf32>
    %120 = vector.shape_cast %85 : vector<2x128xf32> to vector<1x2x128xf32>
    %121 = vector.shape_cast %95 : vector<2x128xf32> to vector<1x2x128xf32>
    %122 = vector.shape_cast %105 : vector<2x128xf32> to vector<1x2x128xf32>
    %123 = tpu.concatenate %119, %120, %121, %122 in 0 : vector<1x2x128xf32>, vector<1x2x128xf32>, vector<1x2x128xf32>, vector<1x2x128xf32> -> vector<4x2x128xf32>
    %124 = arith.addf %118, %123 : vector<4x2x128xf32>
    %c0_76 = arith.constant 0 : index
    %c0_77 = arith.constant 0 : index
    %c0_78 = arith.constant 0 : index
    %c0_79 = arith.constant 0 : index
    %125 = vector.load %arg6[%c0_76, %c0_77, %c0_78, %c0_79] : memref<1x4x2x128xf32, #tpu.memory_space<vmem>>, vector<1x4x2x128xf32>
    %126 = vector.shape_cast %125 : vector<1x4x2x128xf32> to vector<4x2x128xf32>
    %127 = vector.shape_cast %124 : vector<4x2x128xf32> to vector<1x4x2x128xf32>
    tpu.vector_store %arg6[%c0_76, %c0_77, %c0_78, %c0_79], %127 {strides = array<i32>} : memref<1x4x2x128xf32, #tpu.memory_space<vmem>>, vector<1x4x2x128xf32>,
    return
  }
  func.func @transform_0(%arg0: i32, %arg1: i32) -> (i32, i32, i32, i32) {
    %c1_i32 = arith.constant 1 : i32
    %0 = arith.muli %arg0, %c1_i32 : i32
    %1 = arith.addi %0, %arg1 : i32
    %c0_i32 = arith.constant 0 : i32
    %c0_i32_0 = arith.constant 0 : i32
    %c0_i32_1 = arith.constant 0 : i32
    %c0_i32_2 = arith.constant 0 : i32
    return %c0_i32, %c0_i32_0, %1, %c0_i32_1 : i32, i32, i32, i32
  }
  func.func @transform_1(%arg0: i32, %arg1: i32) -> (i32, i32, i32) {
    %c1_i32 = arith.constant 1 : i32
    %0 = arith.muli %arg0, %c1_i32 : i32
    %1 = arith.addi %0, %arg1 : i32
    %c0_i32 = arith.constant 0 : i32
    %c0_i32_0 = arith.constant 0 : i32
    %c0_i32_1 = arith.constant 0 : i32
    return %c0_i32, %1, %c0_i32_0 : i32, i32, i32
  }
  func.func @transform_2(%arg0: i32, %arg1: i32) -> (i32, i32, i32) {
    %c0_i32 = arith.constant 0 : i32
    %c0_i32_0 = arith.constant 0 : i32
    %c0_i32_1 = arith.constant 0 : i32
    return %arg0, %c0_i32, %c0_i32_0 : i32, i32, i32
  }
  func.func @transform_3(%arg0: i32, %arg1: i32) -> (i32, i32, i32, i32) {
    %c0_i32 = arith.constant 0 : i32
    %c0_i32_0 = arith.constant 0 : i32
    %c0_i32_1 = arith.constant 0 : i32
    %c0_i32_2 = arith.constant 0 : i32
    return %arg0, %c0_i32, %c0_i32_0, %c0_i32_1 : i32, i32, i32, i32
  }
  func.func @transform_4(%arg0: i32, %arg1: i32) -> (i32, i32, i32, i32) {
    %c0_i32 = arith.constant 0 : i32
    %c0_i32_0 = arith.constant 0 : i32
    %c0_i32_1 = arith.constant 0 : i32
    %c0_i32_2 = arith.constant 0 : i32
    return %arg0, %c0_i32, %c0_i32_0, %c0_i32_1 : i32, i32, i32, i32
  }
}

</mosaic_0001>

<llo_original>
// kernel: tpu_custom_call.1
$region0: #{tpu_custom_call.1}
  #allocation0 [shape = 'u32[]', space=smem, size = 0x4, offset = 0x4, fixed_abs, tag = 'smem constant byte address 0x4 - core index']
  #allocation1 [shape = 'u32[144,128]{1,0:T(1,128)}', space=vmem, size = 0x12000, scoped, tag = 'internal scratch']
  %s0 = inlined_call_operand.hbm [shape: f32[2,4,32,128], index: 0, kind: input, shape index: {}]
  %s1 = inlined_call_operand.hbm [shape: s8[2,32,128], index: 1, kind: input, shape index: {}]
  %s2 = inlined_call_operand.hbm [shape: f32[1,2,128], index: 2, kind: output, shape index: {0}]
  %s3 = inlined_call_operand.hbm [shape: f32[1,4,2,128], index: 3, kind: output, shape index: {1}]
  %s4 = inlined_call_operand.hbm [shape: f32[1,4,2,128], index: 4, kind: output, shape index: {2}]
  %5 = xla_tuple %s2, %s3, %s4
  %s6 = sld [smem:[#allocation0]]
  $region46: #{tpu_custom_call.1} parent=0
    _
  %s8 = ssub.s32 1, %s6
  %s9 = scalar_select 0, %s8, %s6
  $region1: #{tpu_custom_call.1} parent=0
    #allocation2 [shape = 'u8[131072]{0}', space=vmem, size = 0x20000, scoped, tag = 'input window, operand 0, single buffered']
    #allocation3 [shape = 's32[1]{0}', space=sflag, size = 0x4, scoped, tag = 'scoped memory for tpu_custom_call.1']
    #allocation4 [shape = 's32[1]{0}', space=sflag, size = 0x4, scoped, tag = 'scoped memory for tpu_custom_call.1']
    #allocation5 [shape = 'u8[8192]{0}', space=vmem, size = 0x2000, scoped, tag = 'input window, operand 1, single buffered']
    #allocation6 [shape = 's32[1]{0}', space=sflag, size = 0x4, scoped, tag = 'scoped memory for tpu_custom_call.1']
    #allocation7 [shape = 'u8[1024]{0}', space=vmem, size = 0x400, scoped, tag = 'output window, operand 0, single buffered']
    #allocation8 [shape = 'u8[4096]{0}', space=vmem, size = 0x1000, scoped, tag = 'output window, operand 1, single buffered']
    #allocation9 [shape = 's32[1]{0}', space=sflag, size = 0x4, scoped, tag = 'scoped memory for tpu_custom_call.1']
    #allocation10 [shape = 'u8[4096]{0}', space=vmem, size = 0x1000, scoped, tag = 'output window, operand 2, single buffered']
    %10 = vsyncpa [#allocation3], 0
    %11 = vsyncpa [#allocation6], 0
    %12 = vsyncpa [#allocation4], 0
    %13 = vsyncpa [#allocation9], 0
    // Predicated region
    $region2: #{tpu_custom_call.1} parent=1 // pred_check
      _
    $region3: #{tpu_custom_call.1} parent=1 // pred_check_branch
      %15 = sbr.rel (0) target = $region5
    $region4: #{tpu_custom_call.1} parent=1 // pred_region
      %s16 = sadd.s32 0, 0
      %s17 = smul.u32 4, %s16
      %s19 = ssub.s32 4096, 4096
      %20 = vsyncadd [#allocation3], %s19
      %s21 = smul.addr %s17, 128
      %s22 = scalar_lea.hbm %s0, %s21
      %s23 = sshll.u32 [#allocation2], 4
      %s24 = int_to_ptr.vmem [resolvable:$true] %s23
      %29 = dma.hbm_to_vmem [thread:$0]  %s22, 4096, %s24, [#allocation3], 128, 128, 8
    $region5: #{tpu_custom_call.1} parent=1 // pred_fallthru
      _
    // Predicated region
    $region6: #{tpu_custom_call.1} parent=1 // pred_check
      _
    $region7: #{tpu_custom_call.1} parent=1 // pred_check_branch
      %31 = sbr.rel (0) target = $region9
    $region8: #{tpu_custom_call.1} parent=1 // pred_region
      %s32 = sadd.s32 0, 0
      %s34 = ssub.s32 256, 256
      %35 = vsyncadd [#allocation6], %s34
      %s36 = smul.addr %s32, 128
      %s37 = scalar_lea.hbm %s1, %s36
      %s38 = sshll.u32 [#allocation5], 4
      %s39 = int_to_ptr.vmem [resolvable:$true] %s38
      %44 = dma.hbm_to_vmem [thread:$0]  %s37, 256, %s39, [#allocation6], 128, 128, 8
    $region9: #{tpu_custom_call.1} parent=1 // pred_fallthru
      _
    // Predicated region
    $region10: #{tpu_custom_call.1} parent=1 // pred_check
      _
    $region11: #{tpu_custom_call.1} parent=1 // pred_check_branch
      %46 = sbr.rel (0) target = $region13
    $region12: #{tpu_custom_call.1} parent=1 // pred_region
      %47 = dma.done [#allocation3], 4096
    $region13: #{tpu_custom_call.1} parent=1 // pred_fallthru
      _
    // Predicated region
    $region14: #{tpu_custom_call.1} parent=1 // pred_check
      _
    $region15: #{tpu_custom_call.1} parent=1 // pred_check_branch
      %49 = sbr.rel (0) target = $region17
    $region16: #{tpu_custom_call.1} parent=1 // pred_region
      %50 = dma.done [#allocation6], 256
    $region17: #{tpu_custom_call.1} parent=1 // pred_fallthru
      _
    %s51 = sadd.s32 0, 0
    %s52 = smul.u32 4, %s51
    %s53 = sadd.s32 0, 0
    %p54 = scmp.eq.s32.totalorder 0, 0
    // Predicated region
    $region18: #{tpu_custom_call.1} parent=1 // pred_check
      %p55 = pneg %p54
    $region19: #{tpu_custom_call.1} parent=1 // pred_check_branch
      %57 = sbr.rel (%p55) target = $region21
    $region20: #{tpu_custom_call.1} parent=1 // pred_region
      %58 = vst [vmem:[#allocation7] sm:$0x3] 0.0
      %59 = vst [vmem:[#allocation8] sm:$0x3] 0.0
      %60 = vst [vmem:[#allocation8 + $0x2] sm:$0x3] 0.0
      %61 = vst [vmem:[#allocation8 + $0x4] sm:$0x3] 0.0
      %62 = vst [vmem:[#allocation8 + $0x6] sm:$0x3] 0.0
      %63 = vst [vmem:[#allocation10] sm:$0x3] 0.0
      %64 = vst [vmem:[#allocation10 + $0x2] sm:$0x3] 0.0
      %65 = vst [vmem:[#allocation10 + $0x4] sm:$0x3] 0.0
      %66 = vst [vmem:[#allocation10 + $0x6] sm:$0x3] 0.0
    $region21: #{tpu_custom_call.1} parent=1 // pred_fallthru
      _
    %v67 = vld [vmem:[#allocation5] sm:$0xff]
    %v68 = vld [vmem:[#allocation5 + $0x8] sm:$0xff]
    %v69 = vunpack.c.0.s8 %v67
    %v70 = vunpack.c.1.s8 %v67
    %v71 = vunpack.c.2.s8 %v67
    %v72 = vunpack.c.3.s8 %v67
    %v73 = vunpack.c.0.s8 %v68
    %v74 = vunpack.c.1.s8 %v68
    %v75 = vunpack.c.2.s8 %v68
    %v76 = vunpack.c.3.s8 %v68
    %v77 = vld [vmem:[#allocation2] sm:$0xff]
    %v78 = vld [vmem:[#allocation2 + $0x8] sm:$0xff]
    %v79 = vld [vmem:[#allocation2 + $0x10] sm:$0xff]
    %v80 = vld [vmem:[#allocation2 + $0x18] sm:$0xff]
    %v81 = vld [vmem:[#allocation2 + $0x80] sm:$0xff]
    %v82 = vld [vmem:[#allocation2 + $0x88] sm:$0xff]
    %v83 = vld [vmem:[#allocation2 + $0x90] sm:$0xff]
    %v84 = vld [vmem:[#allocation2 + $0x98] sm:$0xff]
    %s85 = scalar_lea.vmem [#allocation2], 32
    %v86 = vld [vmem:[%s85] sm:$0xff]
    %v87 = vld [vmem:[%s85 + $0x8] sm:$0xff]
    %v88 = vld [vmem:[%s85 + $0x10] sm:$0xff]
    %v89 = vld [vmem:[%s85 + $0x18] sm:$0xff]
    %v90 = vld [vmem:[%s85 + $0x80] sm:$0xff]
    %v91 = vld [vmem:[%s85 + $0x88] sm:$0xff]
    %v92 = vld [vmem:[%s85 + $0x90] sm:$0xff]
    %v93 = vld [vmem:[%s85 + $0x98] sm:$0xff]
    %v94 = vmax.f32 %v77, %v86
    %v95 = vmax.f32 %v78, %v87
    %v96 = vmax.f32 %v79, %v88
    %v97 = vmax.f32 %v80, %v89
    %v98 = vmax.f32 %v81, %v90
    %v99 = vmax.f32 %v82, %v91
    %v100 = vmax.f32 %v83, %v92
    %v101 = vmax.f32 %v84, %v93
    %s102 = scalar_lea.vmem [#allocation2], 64
    %v103 = vld [vmem:[%s102] sm:$0xff]
    %v104 = vld [vmem:[%s102 + $0x8] sm:$0xff]
    %v105 = vld [vmem:[%s102 + $0x10] sm:$0xff]
    %v106 = vld [vmem:[%s102 + $0x18] sm:$0xff]
    %v107 = vld [vmem:[%s102 + $0x80] sm:$0xff]
    %v108 = vld [vmem:[%s102 + $0x88] sm:$0xff]
    %v109 = vld [vmem:[%s102 + $0x90] sm:$0xff]
    %v110 = vld [vmem:[%s102 + $0x98] sm:$0xff]
    %v111 = vmax.f32 %v94, %v103
    %v112 = vmax.f32 %v95, %v104
    %v113 = vmax.f32 %v96, %v105
    %v114 = vmax.f32 %v97, %v106
    %v115 = vmax.f32 %v98, %v107
    %v116 = vmax.f32 %v99, %v108
    %v117 = vmax.f32 %v100, %v109
    %v118 = vmax.f32 %v101, %v110
    %s119 = scalar_lea.vmem [#allocation2], 96
    %v120 = vld [vmem:[%s119] sm:$0xff]
    %v121 = vld [vmem:[%s119 + $0x8] sm:$0xff]
    %v122 = vld [vmem:[%s119 + $0x10] sm:$0xff]
    %v123 = vld [vmem:[%s119 + $0x18] sm:$0xff]
    %v124 = vld [vmem:[%s119 + $0x80] sm:$0xff]
    %v125 = vld [vmem:[%s119 + $0x88] sm:$0xff]
    %v126 = vld [vmem:[%s119 + $0x90] sm:$0xff]
    %v127 = vld [vmem:[%s119 + $0x98] sm:$0xff]
    %v128 = vmax.f32 %v111, %v120
    %v129 = vmax.f32 %v112, %v121
    %v130 = vmax.f32 %v113, %v122
    %v131 = vmax.f32 %v114, %v123
    %v132 = vmax.f32 %v115, %v124
    %v133 = vmax.f32 %v116, %v125
    %v134 = vmax.f32 %v117, %v126
    %v135 = vmax.f32 %v118, %v127
    %v136 = vsub.f32 %v77, %v128
    %v137 = vsub.f32 %v78, %v129
    %v138 = vsub.f32 %v79, %v130
    %v139 = vsub.f32 %v80, %v131
    %v140 = vsub.f32 %v81, %v132
    %v141 = vsub.f32 %v82, %v133
    %v142 = vsub.f32 %v83, %v134
    %v143 = vsub.f32 %v84, %v135
    %v144 = vmul.f32 %v136, 1.442695
    %v145 = vpow.pop %v144
    %v146 = vmul.f32 %v137, 1.442695
    %v147 = vpow.pop %v146
    %v148 = vmul.f32 %v138, 1.442695
    %v149 = vpow.pop %v148
    %v150 = vmul.f32 %v139, 1.442695
    %v151 = vpow.pop %v150
    %v152 = vmul.f32 %v140, 1.442695
    %v153 = vpow.pop %v152
    %v154 = vmul.f32 %v141, 1.442695
    %v155 = vpow.pop %v154
    %v156 = vmul.f32 %v142, 1.442695
    %v157 = vpow.pop %v156
    %v158 = vmul.f32 %v143, 1.442695
    %v159 = vpow.pop %v158
    %vm160 = vcmp.eq.s32.totalorder %v69, 0
    %vm161 = vcmp.eq.s32.totalorder %v70, 0
    %vm162 = vcmp.eq.s32.totalorder %v71, 0
    %vm163 = vcmp.eq.s32.totalorder %v72, 0
    %vm164 = vcmp.eq.s32.totalorder %v73, 0
    %vm165 = vcmp.eq.s32.totalorder %v74, 0
    %vm166 = vcmp.eq.s32.totalorder %v75, 0
    %vm167 = vcmp.eq.s32.totalorder %v76, 0
    %v168 = vsel %vm160, %v136, 0.0
    %v169 = vsel %vm161, %v137, 0.0
    %v170 = vsel %vm162, %v138, 0.0
    %v171 = vsel %vm163, %v139, 0.0
    %v172 = vsel %vm164, %v140, 0.0
    %v173 = vsel %vm165, %v141, 0.0
    %v174 = vsel %vm166, %v142, 0.0
    %v175 = vsel %vm167, %v143, 0.0
    %v176 = vadd.f32 %v168, 0.0
    %v177 = vadd.f32 %v169, 0.0
    %v178 = vadd.f32 %v170, 0.0
    %v179 = vadd.f32 %v171, 0.0
    %v180 = vadd.f32 %v172, 0.0
    %v181 = vadd.f32 %v173, 0.0
    %v182 = vadd.f32 %v174, 0.0
    %v183 = vadd.f32 %v175, 0.0
    %v184 = vsub.f32 %v86, %v128
    %v185 = vsub.f32 %v87, %v129
    %v186 = vsub.f32 %v88, %v130
    %v187 = vsub.f32 %v89, %v131
    %v188 = vsub.f32 %v90, %v132
    %v189 = vsub.f32 %v91, %v133
    %v190 = vsub.f32 %v92, %v134
    %v191 = vsub.f32 %v93, %v135
    %v192 = vmul.f32 %v184, 1.442695
    %v193 = vpow.pop %v192
    %v194 = vmul.f32 %v185, 1.442695
    %v195 = vpow.pop %v194
    %v196 = vmul.f32 %v186, 1.442695
    %v197 = vpow.pop %v196
    %v198 = vmul.f32 %v187, 1.442695
    %v199 = vpow.pop %v198
    %v200 = vmul.f32 %v188, 1.442695
    %v201 = vpow.pop %v200
    %v202 = vmul.f32 %v189, 1.442695
    %v203 = vpow.pop %v202
    %v204 = vmul.f32 %v190, 1.442695
    %v205 = vpow.pop %v204
    %v206 = vmul.f32 %v191, 1.442695
    %v207 = vpow.pop %v206
    %v208 = vadd.f32 %v145, %v193
    %v209 = vadd.f32 %v147, %v195
    %v210 = vadd.f32 %v149, %v197
    %v211 = vadd.f32 %v151, %v199
    %v212 = vadd.f32 %v153, %v201
    %v213 = vadd.f32 %v155, %v203
    %v214 = vadd.f32 %v157, %v205
    %v215 = vadd.f32 %v159, %v207
    %vm216 = vcmp.eq.s32.totalorder %v69, 1
    %vm217 = vcmp.eq.s32.totalorder %v70, 1
    %vm218 = vcmp.eq.s32.totalorder %v71, 1
    %vm219 = vcmp.eq.s32.totalorder %v72, 1
    %vm220 = vcmp.eq.s32.totalorder %v73, 1
    %vm221 = vcmp.eq.s32.totalorder %v74, 1
    %vm222 = vcmp.eq.s32.totalorder %v75, 1
    %vm223 = vcmp.eq.s32.totalorder %v76, 1
    %v224 = vsel %vm216, %v184, 0.0
    %v225 = vsel %vm217, %v185, 0.0
    %v226 = vsel %vm218, %v186, 0.0
    %v227 = vsel %vm219, %v187, 0.0
    %v228 = vsel %vm220, %v188, 0.0
    %v229 = vsel %vm221, %v189, 0.0
    %v230 = vsel %vm222, %v190, 0.0
    %v231 = vsel %vm223, %v191, 0.0
    %v232 = vadd.f32 %v176, %v224
    %v233 = vadd.f32 %v177, %v225
    %v234 = vadd.f32 %v178, %v226
    %v235 = vadd.f32 %v179, %v227
    %v236 = vadd.f32 %v180, %v228
    %v237 = vadd.f32 %v181, %v229
    %v238 = vadd.f32 %v182, %v230
    %v239 = vadd.f32 %v183, %v231
    %v240 = vsub.f32 %v103, %v128
    %v241 = vsub.f32 %v104, %v129
    %v242 = vsub.f32 %v105, %v130
    %v243 = vsub.f32 %v106, %v131
    %v244 = vsub.f32 %v107, %v132
    %v245 = vsub.f32 %v108, %v133
    %v246 = vsub.f32 %v109, %v134
    %v247 = vsub.f32 %v110, %v135
    %v248 = vmul.f32 %v240, 1.442695
    %v249 = vpow.pop %v248
    %v250 = vmul.f32 %v241, 1.442695
    %v251 = vpow.pop %v250
    %v252 = vmul.f32 %v242, 1.442695
    %v253 = vpow.pop %v252
    %v254 = vmul.f32 %v243, 1.442695
    %v255 = vpow.pop %v254
    %v256 = vmul.f32 %v244, 1.442695
    %v257 = vpow.pop %v256
    %v258 = vmul.f32 %v245, 1.442695
    %v259 = vpow.pop %v258
    %v260 = vmul.f32 %v246, 1.442695
    %v261 = vpow.pop %v260
    %v262 = vmul.f32 %v247, 1.442695
    %v263 = vpow.pop %v262
    %v264 = vadd.f32 %v208, %v249
    %v265 = vadd.f32 %v209, %v251
    %v266 = vadd.f32 %v210, %v253
    %v267 = vadd.f32 %v211, %v255
    %v268 = vadd.f32 %v212, %v257
    %v269 = vadd.f32 %v213, %v259
    %v270 = vadd.f32 %v214, %v261
    %v271 = vadd.f32 %v215, %v263
    %vm272 = vcmp.eq.s32.totalorder %v69, 2
    %vm273 = vcmp.eq.s32.totalorder %v70, 2
    %vm274 = vcmp.eq.s32.totalorder %v71, 2
    %vm275 = vcmp.eq.s32.totalorder %v72, 2
    %vm276 = vcmp.eq.s32.totalorder %v73, 2
    %vm277 = vcmp.eq.s32.totalorder %v74, 2
    %vm278 = vcmp.eq.s32.totalorder %v75, 2
    %vm279 = vcmp.eq.s32.totalorder %v76, 2
    %v280 = vsel %vm272, %v240, 0.0
    %v281 = vsel %vm273, %v241, 0.0
    %v282 = vsel %vm274, %v242, 0.0
    %v283 = vsel %vm275, %v243, 0.0
    %v284 = vsel %vm276, %v244, 0.0
    %v285 = vsel %vm277, %v245, 0.0
    %v286 = vsel %vm278, %v246, 0.0
    %v287 = vsel %vm279, %v247, 0.0
    %v288 = vadd.f32 %v232, %v280
    %v289 = vadd.f32 %v233, %v281
    %v290 = vadd.f32 %v234, %v282
    %v291 = vadd.f32 %v235, %v283
    %v292 = vadd.f32 %v236, %v284
    %v293 = vadd.f32 %v237, %v285
    %v294 = vadd.f32 %v238, %v286
    %v295 = vadd.f32 %v239, %v287
    %v296 = vsub.f32 %v120, %v128
    %v297 = vsub.f32 %v121, %v129
    %v298 = vsub.f32 %v122, %v130
    %v299 = vsub.f32 %v123, %v131
    %v300 = vsub.f32 %v124, %v132
    %v301 = vsub.f32 %v125, %v133
    %v302 = vsub.f32 %v126, %v134
    %v303 = vsub.f32 %v127, %v135
    %v304 = vmul.f32 %v296, 1.442695
    %v305 = vpow.pop %v304
    %v306 = vmul.f32 %v297, 1.442695
    %v307 = vpow.pop %v306
    %v308 = vmul.f32 %v298, 1.442695
    %v309 = vpow.pop %v308
    %v310 = vmul.f32 %v299, 1.442695
    %v311 = vpow.pop %v310
    %v312 = vmul.f32 %v300, 1.442695
    %v313 = vpow.pop %v312
    %v314 = vmul.f32 %v301, 1.442695
    %v315 = vpow.pop %v314
    %v316 = vmul.f32 %v302, 1.442695
    %v317 = vpow.pop %v316
    %v318 = vmul.f32 %v303, 1.442695
    %v319 = vpow.pop %v318
    %v320 = vadd.f32 %v264, %v305
    %v321 = vadd.f32 %v265, %v307
    %v322 = vadd.f32 %v266, %v309
    %v323 = vadd.f32 %v267, %v311
    %v324 = vadd.f32 %v268, %v313
    %v325 = vadd.f32 %v269, %v315
    %v326 = vadd.f32 %v270, %v317
    %v327 = vadd.f32 %v271, %v319
    %vm328 = vcmp.eq.s32.totalorder %v69, 3
    %vm329 = vcmp.eq.s32.totalorder %v70, 3
    %vm330 = vcmp.eq.s32.totalorder %v71, 3
    %vm331 = vcmp.eq.s32.totalorder %v72, 3
    %vm332 = vcmp.eq.s32.totalorder %v73, 3
    %vm333 = vcmp.eq.s32.totalorder %v74, 3
    %vm334 = vcmp.eq.s32.totalorder %v75, 3
    %vm335 = vcmp.eq.s32.totalorder %v76, 3
    %v336 = vsel %vm328, %v296, 0.0
    %v337 = vsel %vm329, %v297, 0.0
    %v338 = vsel %vm330, %v298, 0.0
    %v339 = vsel %vm331, %v299, 0.0
    %v340 = vsel %vm332, %v300, 0.0
    %v341 = vsel %vm333, %v301, 0.0
    %v342 = vsel %vm334, %v302, 0.0
    %v343 = vsel %vm335, %v303, 0.0
    %v344 = vadd.f32 %v288, %v336
    %v345 = vadd.f32 %v289, %v337
    %v346 = vadd.f32 %v290, %v338
    %v347 = vadd.f32 %v291, %v339
    %v348 = vadd.f32 %v292, %v340
    %v349 = vadd.f32 %v293, %v341
    %v350 = vadd.f32 %v294, %v342
    %v351 = vadd.f32 %v295, %v343
    %v352 = vlog2.pop %v320
    %v353 = vmul.f32 %v352, 0.6931472
    %v354 = vlog2.pop %v321
    %v355 = vmul.f32 %v354, 0.6931472
    %v356 = vlog2.pop %v322
    %v357 = vmul.f32 %v356, 0.6931472
    %v358 = vlog2.pop %v323
    %v359 = vmul.f32 %v358, 0.6931472
    %v360 = vlog2.pop %v324
    %v361 = vmul.f32 %v360, 0.6931472
    %v362 = vlog2.pop %v325
    %v363 = vmul.f32 %v362, 0.6931472
    %v364 = vlog2.pop %v326
    %v365 = vmul.f32 %v364, 0.6931472
    %v366 = vlog2.pop %v327
    %v367 = vmul.f32 %v366, 0.6931472
    %v368 = vrcp.pop %v320
    %v369 = vrcp.pop %v321
    %v370 = vrcp.pop %v322
    %v371 = vrcp.pop %v323
    %v372 = vrcp.pop %v324
    %v373 = vrcp.pop %v325
    %v374 = vrcp.pop %v326
    %v375 = vrcp.pop %v327
    %v376 = vld [vmem:[#allocation7] sm:$0x3]
    %v377 = vsub.f32 %v353, %v344
    %v378 = vsub.f32 %v355, %v345
    %v379 = vsub.f32 %v357, %v346
    %v380 = vsub.f32 %v359, %v347
    %v381 = vsub.f32 %v361, %v348
    %v382 = vsub.f32 %v363, %v349
    %v383 = vsub.f32 %v365, %v350
    %v384 = vsub.f32 %v367, %v351
    %v385 = vadd.f32 %v377, %v378
    %v386 = vadd.f32 %v385, %v379
    %v387 = vadd.f32 %v386, %v380
    %v388 = vrot.slane %v387, 4
    %v389 = vadd.f32 %v387, %v388
    %v390 = vrot.slane %v389, 2
    %v391 = vadd.f32 %v389, %v390
    %v392 = vrot.slane %v391, 1
    %v393 = vadd.f32 %v391, %v392
    %v394 = vadd.f32 %v381, %v382
    %v395 = vadd.f32 %v394, %v383
    %v396 = vadd.f32 %v395, %v384
    %v397 = vrot.slane %v396, 4
    %v398 = vadd.f32 %v396, %v397
    %v399 = vrot.slane %v398, 2
    %v400 = vadd.f32 %v398, %v399
    %v401 = vrot.slane %v400, 1
    %v402 = vadd.f32 %v400, %v401
    %vm405 = vcmask 1041409
    %v406 = vsel %vm405, %v402, %v393
    %v408 = vadd.f32 %v376, %v406
    %409 = vst [vmem:[#allocation7] sm:$0x3] %v408
    %v410 = vmul.f32 %v145, %v368
    %v411 = vmul.f32 %v147, %v369
    %v412 = vmul.f32 %v149, %v370
    %v413 = vmul.f32 %v151, %v371
    %v414 = vmul.f32 %v153, %v372
    %v415 = vmul.f32 %v155, %v373
    %v416 = vmul.f32 %v157, %v374
    %v417 = vmul.f32 %v159, %v375
    %v418 = vsel %vm160, %v410, 0.0
    %v419 = vsel %vm161, %v411, 0.0
    %v420 = vsel %vm162, %v412, 0.0
    %v421 = vsel %vm163, %v413, 0.0
    %v422 = vsel %vm164, %v414, 0.0
    %v423 = vsel %vm165, %v415, 0.0
    %v424 = vsel %vm166, %v416, 0.0
    %v425 = vsel %vm167, %v417, 0.0
    %v426 = vadd.f32 %v418, %v419
    %v427 = vadd.f32 %v426, %v420
    %v428 = vadd.f32 %v427, %v421
    %v429 = vrot.slane %v428, 4
    %v430 = vadd.f32 %v428, %v429
    %v431 = vrot.slane %v430, 2
    %v432 = vadd.f32 %v430, %v431
    %v433 = vrot.slane %v432, 1
    %v434 = vadd.f32 %v432, %v433
    %v435 = vadd.f32 %v422, %v423
    %v436 = vadd.f32 %v435, %v424
    %v437 = vadd.f32 %v436, %v425
    %v438 = vrot.slane %v437, 4
    %v439 = vadd.f32 %v437, %v438
    %v440 = vrot.slane %v439, 2
    %v441 = vadd.f32 %v439, %v440
    %v442 = vrot.slane %v441, 1
    %v443 = vadd.f32 %v441, %v442
    %v444 = vadd.f32 %v410, 1.0
    %v445 = vadd.f32 %v411, 1.0
    %v446 = vadd.f32 %v412, 1.0
    %v447 = vadd.f32 %v413, 1.0
    %v448 = vadd.f32 %v414, 1.0
    %v449 = vadd.f32 %v415, 1.0
    %v450 = vadd.f32 %v416, 1.0
    %v451 = vadd.f32 %v417, 1.0
    %v452 = vsel %vm160, %v444, %v410
    %v453 = vsel %vm161, %v445, %v411
    %v454 = vsel %vm162, %v446, %v412
    %v455 = vsel %vm163, %v447, %v413
    %v456 = vsel %vm164, %v448, %v414
    %v457 = vsel %vm165, %v449, %v415
    %v458 = vsel %vm166, %v450, %v416
    %v459 = vsel %vm167, %v451, %v417
    %v460 = vadd.f32 %v452, %v453
    %v461 = vadd.f32 %v460, %v454
    %v462 = vadd.f32 %v461, %v455
    %v463 = vrot.slane %v462, 4
    %v464 = vadd.f32 %v462, %v463
    %v465 = vrot.slane %v464, 2
    %v466 = vadd.f32 %v464, %v465
    %v467 = vrot.slane %v466, 1
    %v468 = vadd.f32 %v466, %v467
    %v469 = vadd.f32 %v456, %v457
    %v470 = vadd.f32 %v469, %v458
    %v471 = vadd.f32 %v470, %v459
    %v472 = vrot.slane %v471, 4
    %v473 = vadd.f32 %v471, %v472
    %v474 = vrot.slane %v473, 2
    %v475 = vadd.f32 %v473, %v474
    %v476 = vrot.slane %v475, 1
    %v477 = vadd.f32 %v475, %v476
    %v478 = vmul.f32 %v193, %v368
    %v479 = vmul.f32 %v195, %v369
    %v480 = vmul.f32 %v197, %v370
    %v481 = vmul.f32 %v199, %v371
    %v482 = vmul.f32 %v201, %v372
    %v483 = vmul.f32 %v203, %v373
    %v484 = vmul.f32 %v205, %v374
    %v485 = vmul.f32 %v207, %v375
    %v486 = vsel %vm216, %v478, 0.0
    %v487 = vsel %vm217, %v479, 0.0
    %v488 = vsel %vm218, %v480, 0.0
    %v489 = vsel %vm219, %v481, 0.0
    %v490 = vsel %vm220, %v482, 0.0
    %v491 = vsel %vm221, %v483, 0.0
    %v492 = vsel %vm222, %v484, 0.0
    %v493 = vsel %vm223, %v485, 0.0
    %v494 = vadd.f32 %v486, %v487
    %v495 = vadd.f32 %v494, %v488
    %v496 = vadd.f32 %v495, %v489
    %v497 = vrot.slane %v496, 4
    %v498 = vadd.f32 %v496, %v497
    %v499 = vrot.slane %v498, 2
    %v500 = vadd.f32 %v498, %v499
    %v501 = vrot.slane %v500, 1
    %v502 = vadd.f32 %v500, %v501
    %v503 = vadd.f32 %v490, %v491
    %v504 = vadd.f32 %v503, %v492
    %v505 = vadd.f32 %v504, %v493
    %v506 = vrot.slane %v505, 4
    %v507 = vadd.f32 %v505, %v506
    %v508 = vrot.slane %v507, 2
    %v509 = vadd.f32 %v507, %v508
    %v510 = vrot.slane %v509, 1
    %v511 = vadd.f32 %v509, %v510
    %v512 = vadd.f32 %v478, 1.0
    %v513 = vadd.f32 %v479, 1.0
    %v514 = vadd.f32 %v480, 1.0
    %v515 = vadd.f32 %v481, 1.0
    %v516 = vadd.f32 %v482, 1.0
    %v517 = vadd.f32 %v483, 1.0
    %v518 = vadd.f32 %v484, 1.0
    %v519 = vadd.f32 %v485, 1.0
    %v520 = vsel %vm216, %v512, %v478
    %v521 = vsel %vm217, %v513, %v479
    %v522 = vsel %vm218, %v514, %v480
    %v523 = vsel %vm219, %v515, %v481
    %v524 = vsel %vm220, %v516, %v482
    %v525 = vsel %vm221, %v517, %v483
    %v526 = vsel %vm222, %v518, %v484
    %v527 = vsel %vm223, %v519, %v485
    %v528 = vadd.f32 %v520, %v521
    %v529 = vadd.f32 %v528, %v522
    %v530 = vadd.f32 %v529, %v523
    %v531 = vrot.slane %v530, 4
    %v532 = vadd.f32 %v530, %v531
    %v533 = vrot.slane %v532, 2
    %v534 = vadd.f32 %v532, %v533
    %v535 = vrot.slane %v534, 1
    %v536 = vadd.f32 %v534, %v535
    %v537 = vadd.f32 %v524, %v525
    %v538 = vadd.f32 %v537, %v526
    %v539 = vadd.f32 %v538, %v527
    %v540 = vrot.slane %v539, 4
    %v541 = vadd.f32 %v539, %v540
    %v542 = vrot.slane %v541, 2
    %v543 = vadd.f32 %v541, %v542
    %v544 = vrot.slane %v543, 1
    %v545 = vadd.f32 %v543, %v544
    %v546 = vmul.f32 %v249, %v368
    %v547 = vmul.f32 %v251, %v369
    %v548 = vmul.f32 %v253, %v370
    %v549 = vmul.f32 %v255, %v371
    %v550 = vmul.f32 %v257, %v372
    %v551 = vmul.f32 %v259, %v373
    %v552 = vmul.f32 %v261, %v374
    %v553 = vmul.f32 %v263, %v375
    %v554 = vsel %vm272, %v546, 0.0
    %v555 = vsel %vm273, %v547, 0.0
    %v556 = vsel %vm274, %v548, 0.0
    %v557 = vsel %vm275, %v549, 0.0
    %v558 = vsel %vm276, %v550, 0.0
    %v559 = vsel %vm277, %v551, 0.0
    %v560 = vsel %vm278, %v552, 0.0
    %v561 = vsel %vm279, %v553, 0.0
    %v562 = vadd.f32 %v554, %v555
    %v563 = vadd.f32 %v562, %v556
    %v564 = vadd.f32 %v563, %v557
    %v565 = vrot.slane %v564, 4
    %v566 = vadd.f32 %v564, %v565
    %v567 = vrot.slane %v566, 2
    %v568 = vadd.f32 %v566, %v567
    %v569 = vrot.slane %v568, 1
    %v570 = vadd.f32 %v568, %v569
    %v571 = vadd.f32 %v558, %v559
    %v572 = vadd.f32 %v571, %v560
    %v573 = vadd.f32 %v572, %v561
    %v574 = vrot.slane %v573, 4
    %v575 = vadd.f32 %v573, %v574
    %v576 = vrot.slane %v575, 2
    %v577 = vadd.f32 %v575, %v576
    %v578 = vrot.slane %v577, 1
    %v579 = vadd.f32 %v577, %v578
    %v580 = vadd.f32 %v546, 1.0
    %v581 = vadd.f32 %v547, 1.0
    %v582 = vadd.f32 %v548, 1.0
    %v583 = vadd.f32 %v549, 1.0
    %v584 = vadd.f32 %v550, 1.0
    %v585 = vadd.f32 %v551, 1.0
    %v586 = vadd.f32 %v552, 1.0
    %v587 = vadd.f32 %v553, 1.0
    %v588 = vsel %vm272, %v580, %v546
    %v589 = vsel %vm273, %v581, %v547
    %v590 = vsel %vm274, %v582, %v548
    %v591 = vsel %vm275, %v583, %v549
    %v592 = vsel %vm276, %v584, %v550
    %v593 = vsel %vm277, %v585, %v551
    %v594 = vsel %vm278, %v586, %v552
    %v595 = vsel %vm279, %v587, %v553
    %v596 = vadd.f32 %v588, %v589
    %v597 = vadd.f32 %v596, %v590
    %v598 = vadd.f32 %v597, %v591
    %v599 = vrot.slane %v598, 4
    %v600 = vadd.f32 %v598, %v599
    %v601 = vrot.slane %v600, 2
    %v602 = vadd.f32 %v600, %v601
    %v603 = vrot.slane %v602, 1
    %v604 = vadd.f32 %v602, %v603
    %v605 = vadd.f32 %v592, %v593
    %v606 = vadd.f32 %v605, %v594
    %v607 = vadd.f32 %v606, %v595
    %v608 = vrot.slane %v607, 4
    %v609 = vadd.f32 %v607, %v608
    %v610 = vrot.slane %v609, 2
    %v611 = vadd.f32 %v609, %v610
    %v612 = vrot.slane %v611, 1
    %v613 = vadd.f32 %v611, %v612
    %v614 = vmul.f32 %v305, %v368
    %v615 = vmul.f32 %v307, %v369
    %v616 = vmul.f32 %v309, %v370
    %v617 = vmul.f32 %v311, %v371
    %v618 = vmul.f32 %v313, %v372
    %v619 = vmul.f32 %v315, %v373
    %v620 = vmul.f32 %v317, %v374
    %v621 = vmul.f32 %v319, %v375
    %v622 = vsel %vm328, %v614, 0.0
    %v623 = vsel %vm329, %v615, 0.0
    %v624 = vsel %vm330, %v616, 0.0
    %v625 = vsel %vm331, %v617, 0.0
    %v626 = vsel %vm332, %v618, 0.0
    %v627 = vsel %vm333, %v619, 0.0
    %v628 = vsel %vm334, %v620, 0.0
    %v629 = vsel %vm335, %v621, 0.0
    %v630 = vadd.f32 %v622, %v623
    %v631 = vadd.f32 %v630, %v624
    %v632 = vadd.f32 %v631, %v625
    %v633 = vrot.slane %v632, 4
    %v634 = vadd.f32 %v632, %v633
    %v635 = vrot.slane %v634, 2
    %v636 = vadd.f32 %v634, %v635
    %v637 = vrot.slane %v636, 1
    %v638 = vadd.f32 %v636, %v637
    %v639 = vadd.f32 %v626, %v627
    %v640 = vadd.f32 %v639, %v628
    %v641 = vadd.f32 %v640, %v629
    %v642 = vrot.slane %v641, 4
    %v643 = vadd.f32 %v641, %v642
    %v644 = vrot.slane %v643, 2
    %v645 = vadd.f32 %v643, %v644
    %v646 = vrot.slane %v645, 1
    %v647 = vadd.f32 %v645, %v646
    %v648 = vadd.f32 %v614, 1.0
    %v649 = vadd.f32 %v615, 1.0
    %v650 = vadd.f32 %v616, 1.0
    %v651 = vadd.f32 %v617, 1.0
    %v652 = vadd.f32 %v618, 1.0
    %v653 = vadd.f32 %v619, 1.0
    %v654 = vadd.f32 %v620, 1.0
    %v655 = vadd.f32 %v621, 1.0
    %v656 = vsel %vm328, %v648, %v614
    %v657 = vsel %vm329, %v649, %v615
    %v658 = vsel %vm330, %v650, %v616
    %v659 = vsel %vm331, %v651, %v617
    %v660 = vsel %vm332, %v652, %v618
    %v661 = vsel %vm333, %v653, %v619
    %v662 = vsel %vm334, %v654, %v620
    %v663 = vsel %vm335, %v655, %v621
    %v664 = vadd.f32 %v656, %v657
    %v665 = vadd.f32 %v664, %v658
    %v666 = vadd.f32 %v665, %v659
    %v667 = vrot.slane %v666, 4
    %v668 = vadd.f32 %v666, %v667
    %v669 = vrot.slane %v668, 2
    %v670 = vadd.f32 %v668, %v669
    %v671 = vrot.slane %v670, 1
    %v672 = vadd.f32 %v670, %v671
    %v673 = vadd.f32 %v660, %v661
    %v674 = vadd.f32 %v673, %v662
    %v675 = vadd.f32 %v674, %v663
    %v676 = vrot.slane %v675, 4
    %v677 = vadd.f32 %v675, %v676
    %v678 = vrot.slane %v677, 2
    %v679 = vadd.f32 %v677, %v678
    %v680 = vrot.slane %v679, 1
    %v681 = vadd.f32 %v679, %v680
    %v682 = vld [vmem:[#allocation8] sm:$0x3]
    %v683 = vld [vmem:[#allocation8 + $0x2] sm:$0x3]
    %v684 = vld [vmem:[#allocation8 + $0x4] sm:$0x3]
    %v685 = vld [vmem:[#allocation8 + $0x6] sm:$0x3]
    %v694 = vrot.slane %v443, 7
    %v695 = vsel %vm405, %v694, %v434
    %v696 = vrot.slane %v511, 7
    %v697 = vsel %vm405, %v696, %v502
    %v698 = vrot.slane %v579, 7
    %v699 = vsel %vm405, %v698, %v570
    %v700 = vrot.slane %v647, 7
    %v701 = vsel %vm405, %v700, %v638
    %v706 = vadd.f32 %v682, %v695
    %v707 = vadd.f32 %v683, %v697
    %v708 = vadd.f32 %v684, %v699
    %v709 = vadd.f32 %v685, %v701
    %710 = vst [vmem:[#allocation8] sm:$0x3] %v706
    %711 = vst [vmem:[#allocation8 + $0x2] sm:$0x3] %v707
    %712 = vst [vmem:[#allocation8 + $0x4] sm:$0x3] %v708
    %713 = vst [vmem:[#allocation8 + $0x6] sm:$0x3] %v709
    %v714 = vld [vmem:[#allocation10] sm:$0x3]
    %v715 = vld [vmem:[#allocation10 + $0x2] sm:$0x3]
    %v716 = vld [vmem:[#allocation10 + $0x4] sm:$0x3]
    %v717 = vld [vmem:[#allocation10 + $0x6] sm:$0x3]
    %v726 = vrot.slane %v477, 7
    %v727 = vsel %vm405, %v726, %v468
    %v728 = vrot.slane %v545, 7
    %v729 = vsel %vm405, %v728, %v536
    %v730 = vrot.slane %v613, 7
    %v731 = vsel %vm405, %v730, %v604
    %v732 = vrot.slane %v681, 7
    %v733 = vsel %vm405, %v732, %v672
    %v738 = vadd.f32 %v714, %v727
    %v739 = vadd.f32 %v715, %v729
    %v740 = vadd.f32 %v716, %v731
    %v741 = vadd.f32 %v717, %v733
    %742 = vst [vmem:[#allocation10] sm:$0x3] %v738
    %743 = vst [vmem:[#allocation10 + $0x2] sm:$0x3] %v739
    %744 = vst [vmem:[#allocation10 + $0x4] sm:$0x3] %v740
    %745 = vst [vmem:[#allocation10 + $0x6] sm:$0x3] %v741
    // Predicated region
    $region22: #{tpu_custom_call.1} parent=1 // pred_check
      _
    $region23: #{tpu_custom_call.1} parent=1 // pred_check_branch
      %747 = sbr.rel (0) target = $region25
    $region24: #{tpu_custom_call.1} parent=1 // pred_region
      %s749 = ssub.s32 32, 32
      %750 = vsyncadd [#allocation4], %s749
      %s752 = sshll.u32 [#allocation7], 4
      %s753 = int_to_ptr.vmem [resolvable:$true] %s752
      %755 = dma.vmem_to_hbm [thread:$0]  %s753, 32, %s2, [#allocation4]
    $region25: #{tpu_custom_call.1} parent=1 // pred_fallthru
      _
    // Predicated region
    $region26: #{tpu_custom_call.1} parent=1 // pred_check
      _
    $region27: #{tpu_custom_call.1} parent=1 // pred_check_branch
      %757 = sbr.rel (0) target = $region29
    $region28: #{tpu_custom_call.1} parent=1 // pred_region
      %s759 = ssub.s32 128, 128
      %760 = vsyncadd [#allocation9], %s759
      %s761 = sshll.u32 [#allocation8], 4
      %s762 = int_to_ptr.vmem [resolvable:$true] %s761
      %767 = dma.vmem_to_hbm [thread:$0]  %s762, 128, %s3, [#allocation9], 32, 32, 2
    $region29: #{tpu_custom_call.1} parent=1 // pred_fallthru
      _
    // Predicated region
    $region30: #{tpu_custom_call.1} parent=1 // pred_check
      _
    $region31: #{tpu_custom_call.1} parent=1 // pred_check_branch
      %769 = sbr.rel (0) target = $region33
    $region32: #{tpu_custom_call.1} parent=1 // pred_region
      %s771 = ssub.s32 128, 128
      %772 = vsyncadd [#allocation9], %s771
      %s773 = sshll.u32 [#allocation10], 4
      %s774 = int_to_ptr.vmem [resolvable:$true] %s773
      %779 = dma.vmem_to_hbm [thread:$0]  %s774, 128, %s4, [#allocation9], 32, 32, 2
    $region33: #{tpu_custom_call.1} parent=1 // pred_fallthru
      _
    // Predicated region
    $region34: #{tpu_custom_call.1} parent=1 // pred_check
      _
    $region35: #{tpu_custom_call.1} parent=1 // pred_check_branch
      %781 = sbr.rel (0) target = $region37
    $region36: #{tpu_custom_call.1} parent=1 // pred_region
      %782 = dma.done [#allocation4], 32
    $region37: #{tpu_custom_call.1} parent=1 // pred_fallthru
      _
    // Predicated region
    $region38: #{tpu_custom_call.1} parent=1 // pred_check
      _
    $region39: #{tpu_custom_call.1} parent=1 // pred_check_branch
      %784 = sbr.rel (0) target = $region41
    $region40: #{tpu_custom_call.1} parent=1 // pred_region
      %785 = dma.done [#allocation9], 128
    $region41: #{tpu_custom_call.1} parent=1 // pred_fallthru
      _
    // Predicated region
    $region42: #{tpu_custom_call.1} parent=1 // pred_check
      _
    $region43: #{tpu_custom_call.1} parent=1 // pred_check_branch
      %787 = sbr.rel (0) target = $region45
    $region44: #{tpu_custom_call.1} parent=1 // pred_region
      %788 = dma.done [#allocation9], 128
    $region45: #{tpu_custom_call.1} parent=1 // pred_fallthru
      _
    %789 = vsyncpa [#allocation3], 1
    %790 = vsyncpa [#allocation6], 1
    %791 = vsyncpa [#allocation4], 1
    %792 = vsyncpa [#allocation9], 1

</llo_original>
